<compile_context>
chip_gen: v7x
topology: tpu7x:2x2x1
jax: 0.10.0
libtpu: 0.0.40
codegen_flags: <defaults>
</compile_context>

<pallas_src>
import jax
import jax.numpy as jnp
from jax.experimental import pallas as pl
from jax.experimental.pallas import tpu as pltpu

_LANE = 128


def _drop_path_kernel(scale_ref, x_ref, o_ref):
    # scale_ref: (B,1[,1]) per-sample scale in x.dtype, resident across the grid.
    o_ref[...] = x_ref[...] * scale_ref[...]


def _drop_path_residual_kernel(scale_ref, x_ref, res_ref, o_ref):
    o_ref[...] = res_ref[...] + x_ref[...] * scale_ref[...]


def _round_up(v, m):
    return (v + m - 1) // m * m


def _round_down(v, m):
    return v // m * m


def drop_path(x, key, drop_prob: float = 0.0, training: bool = False, *,
              residual=None, block_bytes: int = 4 << 20, donate_x: bool = False):
    """Pallas DropPath. Optionally fuses a residual add: residual + drop_path(x)."""
    if drop_prob == 0.0 or not training:
        return x if residual is None else residual + x

    keep_prob = 1.0 - float(drop_prob)
    orig_shape = x.shape
    B = int(orig_shape[0])
    N = 1
    for d in orig_shape[1:]:
        N *= int(d)
    N = max(N, 1)
    itemsize = jnp.dtype(x.dtype).itemsize

    # Per-sample binary keep mask and scale (tiny glue, computed outside the kernel).
    rand = jax.random.uniform(key, (B,), dtype=jnp.float32)
    mask = jnp.floor(keep_prob + rand)                        # 0.0 or 1.0
    inv_keep = (1.0 / keep_prob) if keep_prob > 0.0 else 0.0  # guard drop_prob == 1.0
    scale = (mask * inv_keep).astype(x.dtype)

    fused = residual is not None
    kernel = _drop_path_residual_kernel if fused else _drop_path_kernel
    n_stream = 3 if fused else 2  # streamed tensors: x [, residual], out
    cost = pl.CostEstimate(
        flops=(2 if fused else 1) * B * N,
        transcendentals=0,
        bytes_accessed=n_stream * B * N * itemsize + B * itemsize,
    )
    cparams = pltpu.CompilerParams(
        dimension_semantics=("parallel",),
        vmem_limit_bytes=32 * 1024 * 1024,
    )
    extra_kwargs = {}
    if donate_x:
        # Inputs are (scale, x[, residual]); alias x (operand 1) to output 0.
        extra_kwargs["input_output_aliases"] = {1: 0}

    if N % _LANE == 0:
        # ---- 3D layout: features on (sublane, lane); batch stays a leading dim ----
        R = N // _LANE
        x2 = x.reshape(B, R, _LANE)
        scale2 = scale.reshape(B, 1, 1)
        ops = [scale2, x2]
        if fused:
            ops.append(residual.reshape(B, R, _LANE))

        # Rows per block: ~block_bytes per streamed tensor, sublane multiple of 8.
        row_bytes = B * _LANE * itemsize
        tr = max(8, _round_down(block_bytes // row_bytes, 8))
        if R >= 16:  # keep >=2 grid steps so v7x can shard across both TensorCores
            tr = min(tr, max(8, _round_down(R // 2, 8)))
        if tr >= R:
            tr = R   # full-extent block (allowed even if R % 8 != 0)
        grid_n = pl.cdiv(R, tr)

        blk = pl.BlockSpec((B, tr, _LANE), lambda j: (0, j, 0))
        in_specs = [pl.BlockSpec((B, 1, 1), lambda j: (0, 0, 0)), blk]
        if fused:
            in_specs.append(blk)
        out_shape = jax.ShapeDtypeStruct((B, R, _LANE), x.dtype)
    else:
        # ---- 2D fallback: (B, N); Pallas masks the partial tail block (no pad) ----
        x2 = x.reshape(B, N)
        scale2 = scale.reshape(B, 1)
        ops = [scale2, x2]
        if fused:
            ops.append(residual.reshape(B, N))

        # VMEM tile pads B up to the dtype's sublane pack; size tn against B_pad.
        sub_pack = {1: 32, 2: 16, 4: 8}.get(itemsize, 8)
        b_pad = _round_up(B, sub_pack)
        tn = max(_LANE, _round_down(block_bytes // (b_pad * itemsize), _LANE))
        if N >= 2 * _LANE:  # keep >=2 grid steps for v7x megacore sharding
            tn = min(tn, max(_LANE, _round_down(N // 2, _LANE)))
        if tn >= N:
            tn = N   # full-extent block (allowed even if N % 128 != 0)
        grid_n = pl.cdiv(N, tn)

        blk = pl.BlockSpec((B, tn), lambda j: (0, j))
        in_specs = [pl.BlockSpec((B, 1), lambda j: (0, 0)), blk]
        if fused:
            in_specs.append(blk)
        out_shape = jax.ShapeDtypeStruct((B, N), x.dtype)

    out2 = pl.pallas_call(
        kernel,
        out_shape=out_shape,
        grid_spec=pltpu.PrefetchScalarGridSpec(
            num_scalar_prefetch=0,
            grid=(grid_n,),
            in_specs=in_specs,
            out_specs=blk,
        ),
        compiler_params=cparams,
        cost_estimate=cost,
        **extra_kwargs,
    )(*ops)

    return out2.reshape(orig_shape)


class DropPath:
    """Mirror of the PyTorch DropPath module (forward pass)."""

    def __init__(self, drop_prob=None):
        self.drop_prob = drop_prob
        self.training = True

    def __call__(self, x, key, residual=None):
        p = 0.0 if self.drop_prob is None else self.drop_prob
        return drop_path(x, key, p, self.training, residual=residual)


if __name__ == "__main__":
    root = jax.random.PRNGKey(0)
    k_x, k_mask, k_res, k_x2 = jax.random.split(root, 4)

    B, C, H, W = 2, 4, 16, 16
    x = jax.random.normal(k_x, (B, C, H, W), dtype=jnp.float32)

    module = DropPath(drop_prob=0.3)
    module.training = True
    out = jax.block_until_ready(module(x, k_mask))

    # Reference check in plain JAX (same RNG draw as the wrapper).
    keep_prob = 1.0 - 0.3
    rand = jax.random.uniform(k_mask, (B,), dtype=jnp.float32)
    mask = jnp.floor(keep_prob + rand).reshape(B, 1, 1, 1)
    ref = x / keep_prob * mask
    assert jnp.allclose(out, ref, rtol=1e-5, atol=1e-6), "mismatch vs reference"

    # Fused residual-add variant: residual + drop_path(x).
    res = jax.random.normal(k_res, (B, C, H, W), dtype=jnp.float32)
    out_fused = jax.block_until_ready(module(x, k_mask, residual=res))
    assert jnp.allclose(out_fused, res + ref, rtol=1e-5, atol=1e-5), "fused mismatch"

    # Non-multiple-of-128 feature size exercises the masked-tail 2D path (no pad/slice).
    x_odd = jax.random.normal(k_x2, (B, 3, 11, 13), dtype=jnp.float32)
    out_odd = jax.block_until_ready(drop_path(x_odd, k_mask, 0.3, True))
    ref_odd = x_odd / keep_prob * mask
    assert jnp.allclose(out_odd, ref_odd, rtol=1e-5, atol=1e-6), "odd-N mismatch"

    # Eval / drop_prob==0 path returns input unchanged.
    module.training = False
    out_eval = jax.block_until_ready(module(x, k_mask))
    assert jnp.array_equal(out_eval, x)

    # drop_prob == 1.0 guard: all samples dropped -> zeros (no NaN).
    out_dropped = jax.block_until_ready(drop_path(x, k_mask, 1.0, True))
    assert jnp.array_equal(out_dropped, jnp.zeros_like(x))

    print("KERNEL_OK")
</pallas_src>

<mosaic_0001>
module attributes {stable_mosaic.version = 11 : i64} {
  func.func @_drop_path_kernel(%arg0: i32, %arg1: memref<2x1x1xf32, #tpu.memory_space<vmem>>, %arg2: memref<2x8x128xf32, #tpu.memory_space<vmem>>, %arg3: memref<2x8x128xf32, #tpu.memory_space<vmem>>) attributes {dimension_semantics = [#tpu.dimension_semantics<parallel>], iteration_bounds = array<i64: 1>, scalar_prefetch = 0 : i64, scratch_operands = 0 : i64, tpu.core_type = #tpu.core_type<tc>, window_params = [{pipeline_mode = #tpu.pipeline_mode<synchronous>, transform_indices = @transform_0, window_bounds = array<i64: 2, 1, 1>}, {transform_indices = @transform_1, window_bounds = array<i64: 2, 8, 128>}, {transform_indices = @transform_2, window_bounds = array<i64: 2, 8, 128>}]} {
    %c0 = arith.constant 0 : index
    %c0_0 = arith.constant 0 : index
    %c0_1 = arith.constant 0 : index
    %0 = vector.load %arg2[%c0, %c0_0, %c0_1] : memref<2x8x128xf32, #tpu.memory_space<vmem>>, vector<2x8x128xf32>
    %c0_2 = arith.constant 0 : index
    %c0_3 = arith.constant 0 : index
    %c0_4 = arith.constant 0 : index
    %1 = vector.load %arg1[%c0_2, %c0_3, %c0_4] : memref<2x1x1xf32, #tpu.memory_space<vmem>>, vector<2x1x1xf32>
    %2 = vector.broadcast %1 : vector<2x1x1xf32> to vector<2x8x128xf32>
    %3 = arith.mulf %0, %2 : vector<2x8x128xf32>
    %c0_5 = arith.constant 0 : index
    %c0_6 = arith.constant 0 : index
    %c0_7 = arith.constant 0 : index
    %4 = vector.load %arg3[%c0_5, %c0_6, %c0_7] : memref<2x8x128xf32, #tpu.memory_space<vmem>>, vector<2x8x128xf32>
    tpu.vector_store %arg3[%c0_5, %c0_6, %c0_7], %3 {strides = array<i32>} : memref<2x8x128xf32, #tpu.memory_space<vmem>>, vector<2x8x128xf32>,
    return
  }
  func.func @transform_0(%arg0: i32) -> (i32, i32, i32) {
    %c0_i32 = arith.constant 0 : i32
    %c0_i32_0 = arith.constant 0 : i32
    %c0_i32_1 = arith.constant 0 : i32
    %c0_i32_2 = arith.constant 0 : i32
    return %c0_i32, %c0_i32_0, %c0_i32_1 : i32, i32, i32
  }
  func.func @transform_1(%arg0: i32) -> (i32, i32, i32) {
    %c0_i32 = arith.constant 0 : i32
    %c0_i32_0 = arith.constant 0 : i32
    %c0_i32_1 = arith.constant 0 : i32
    return %c0_i32, %arg0, %c0_i32_0 : i32, i32, i32
  }
  func.func @transform_2(%arg0: i32) -> (i32, i32, i32) {
    %c0_i32 = arith.constant 0 : i32
    %c0_i32_0 = arith.constant 0 : i32
    %c0_i32_1 = arith.constant 0 : i32
    return %c0_i32, %arg0, %c0_i32_0 : i32, i32, i32
  }
}

</mosaic_0001>

<llo_original>
// kernel: tpu_custom_call.1
$region0: #{tpu_custom_call.1}
  #allocation0 [shape = 'u32[]', space=smem, size = 0x4, offset = 0x4, fixed_abs, tag = 'smem constant byte address 0x4 - core index']
  #allocation1 [shape = 'u32[144,128]{1,0:T(1,128)}', space=vmem, size = 0x12000, scoped, tag = 'internal scratch']
  %s0 = inlined_call_operand.vmem [shape: f32[2,1,1], index: 0, kind: input, shape index: {}]
  %s1 = inlined_call_operand.hbm [shape: f32[2,8,128], index: 1, kind: input, shape index: {}]
  %s2 = inlined_call_operand.hbm [shape: f32[2,8,128], index: 2, kind: output, shape index: {}]
  %s3 = sld [smem:[#allocation0]]
  $region22: #{tpu_custom_call.1} parent=0
    _
  %s5 = ssub.s32 1, %s3
  %s6 = scalar_select 0, %s5, %s3
  $region1: #{tpu_custom_call.1} parent=0
    #allocation2 [shape = 'u8[8192]{0}', space=vmem, size = 0x2000, scoped, tag = 'input window, operand 1, single buffered']
    #allocation3 [shape = 's32[1]{0}', space=sflag, size = 0x4, scoped, tag = 'scoped memory for tpu_custom_call.1']
    #allocation4 [shape = 's32[1]{0}', space=sflag, size = 0x4, scoped, tag = 'scoped memory for tpu_custom_call.1']
    #allocation5 [shape = 'u8[8192]{0}', space=vmem, size = 0x2000, scoped, tag = 'output window, operand 0, single buffered']
    %7 = vsyncpa [#allocation3], 0
    %8 = vsyncpa [#allocation4], 0
    // Predicated region
    $region2: #{tpu_custom_call.1} parent=1 // pred_check
      _
    $region3: #{tpu_custom_call.1} parent=1 // pred_check_branch
      %10 = sbr.rel (0) target = $region5
    $region4: #{tpu_custom_call.1} parent=1 // pred_region
      _
    $region5: #{tpu_custom_call.1} parent=1 // pred_fallthru
      _
    // Predicated region
    $region6: #{tpu_custom_call.1} parent=1 // pred_check
      _
    $region7: #{tpu_custom_call.1} parent=1 // pred_check_branch
      %12 = sbr.rel (0) target = $region9
    $region8: #{tpu_custom_call.1} parent=1 // pred_region
      %s14 = ssub.s32 256, 256
      %15 = vsyncadd [#allocation3], %s14
      %s16 = sshll.u32 [#allocation2], 4
      %s17 = int_to_ptr.vmem [resolvable:$true] %s16
      %22 = dma.hbm_to_vmem [thread:$0]  %s1, 256, %s17, [#allocation3], 128, 128, 8
    $region9: #{tpu_custom_call.1} parent=1 // pred_fallthru
      _
    // Predicated region
    $region10: #{tpu_custom_call.1} parent=1 // pred_check
      _
    $region11: #{tpu_custom_call.1} parent=1 // pred_check_branch
      %24 = sbr.rel (0) target = $region13
    $region12: #{tpu_custom_call.1} parent=1 // pred_region
      %25 = dma.done [#allocation3], 256
    $region13: #{tpu_custom_call.1} parent=1 // pred_fallthru
      _
    %v26 = vld [vmem:[#allocation2] sm:$0xff]
    %v27 = vld [vmem:[#allocation2 + $0x8] sm:$0xff]
    %v28 = vld [vmem:[%s0] sm:$0x1]
    %v29 = vld [vmem:[%s0 + $0x1] sm:$0x1]
    %v32 = vlaneseq
    %v33 = vshrl.u32 %v32, 7
    %v34 = vsub.s32 0, %v33
    %v35 = vrot.slane %v28, %v34
    %v36 = vlaneseq
    %v37 = vshrl.u32 %v36, 7
    %v38 = vsub.s32 0, %v37
    %v39 = vrot.slane %v29, %v38
    %40 = vset.pattern.permute.xlu0 0
    %41 = vperm.xlu0 %40, %v35
    %v42 = vpop.permute.xlu0 %41
    %44 = vset.pattern.permute.xlu0 0
    %45 = vperm.xlu0 %44, %v39
    %v46 = vpop.permute.xlu0 %45
    %v48 = vmul.f32 %v26, %v42
    %v49 = vmul.f32 %v27, %v46
    %50 = vst [vmem:[#allocation5] sm:$0xff] %v48
    %51 = vst [vmem:[#allocation5 + $0x8] sm:$0xff] %v49
    // Predicated region
    $region14: #{tpu_custom_call.1} parent=1 // pred_check
      _
    $region15: #{tpu_custom_call.1} parent=1 // pred_check_branch
      %53 = sbr.rel (0) target = $region17
    $region16: #{tpu_custom_call.1} parent=1 // pred_region
      %s55 = ssub.s32 256, 256
      %56 = vsyncadd [#allocation4], %s55
      %s57 = sshll.u32 [#allocation5], 4
      %s58 = int_to_ptr.vmem [resolvable:$true] %s57
      %63 = dma.vmem_to_hbm [thread:$0]  %s58, 256, %s2, [#allocation4], 128, 128, 8
    $region17: #{tpu_custom_call.1} parent=1 // pred_fallthru
      _
    // Predicated region
    $region18: #{tpu_custom_call.1} parent=1 // pred_check
      _
    $region19: #{tpu_custom_call.1} parent=1 // pred_check_branch
      %65 = sbr.rel (0) target = $region21
    $region20: #{tpu_custom_call.1} parent=1 // pred_region
      %66 = dma.done [#allocation4], 256
    $region21: #{tpu_custom_call.1} parent=1 // pred_fallthru
      _
    %67 = vsyncpa [#allocation3], 1
    %68 = vsyncpa [#allocation4], 1

</llo_original>
